<compile_context>
chip_gen: v5e
topology: v5e:2x2
jax: 0.10.0
libtpu: 0.0.40
codegen_flags: <defaults>
</compile_context>

<pallas_src>
import functools

import jax
import jax.numpy as jnp
from jax.experimental import pallas as pl
from jax.experimental.pallas import tpu as pltpu

EPS = 1e-6
NUM_CLASSES = 4
_LANES = 128
_SUBLANES = 8


def _round_up(x, m):
    return ((x + m - 1) // m) * m


def _fold_to_8x128(v, ts):
    """(ts, 128) f32 -> (8, 128) partial sums.  Pure VPU slab adds when ts % 8 == 0."""
    if ts % _SUBLANES == 0:
        return v.reshape(ts // _SUBLANES, _SUBLANES, _LANES).sum(axis=0)
    # Tiny-input fallback (R < 8): reduce to one row and park it in sublane 0.
    row = jnp.sum(v, axis=0, keepdims=True)                                    # (1, 128)
    sub = jax.lax.broadcasted_iota(jnp.int32, (_SUBLANES, _LANES), 0)
    return jnp.where(sub == 0, jnp.broadcast_to(row, (_SUBLANES, _LANES)), 0.0)


# ----------------------------------------------------------------------------
# Pallas kernel: weighted softmax cross-entropy, partial-sum outputs per batch elem
# ----------------------------------------------------------------------------
def _balanced_ce_kernel(w_ref, t_ref, x_ref, num_ref, den_ref, *,
                        num_classes, ts, rows):
    """One grid step = one (ts, 128)-pixel tile of one batch element.

    w_ref:   (C,)          f32 SMEM (scalar-prefetched class weights)
    t_ref:   (ts, 128)     i32 target class indices
    x_ref:   (C, ts, 128)  logits in the caller's dtype (upcast in-kernel)
    num_ref: (8, 128)      f32 running sum of weight[t] * NLL   (revisited across j)
    den_ref: (8, 128)      f32 running sum of weight[t]         (revisited across j)
    """
    j = pl.program_id(1)

    @pl.when(j == 0)
    def _():
        num_ref[...] = jnp.zeros_like(num_ref)
        den_ref[...] = jnp.zeros_like(den_ref)

    # Per-class slabs (ts, 128): class axis is a leading dim, so every class reduction
    # below is elementwise VPU work on lane/sublane-dense tiles.
    xs = [x_ref[c].astype(jnp.float32) for c in range(num_classes)]
    t = t_ref[...]                                                  # (ts, 128) i32

    # Validity mask for ragged last row-tile (block may over-cover the array).
    row_ids = j * ts + jax.lax.broadcasted_iota(jnp.int32, (ts, _LANES), 0)
    valid = row_ids < rows

    # Numerically stable log-sum-exp over classes.
    m = xs[0]
    for c in range(1, num_classes):
        m = jnp.maximum(m, xs[c])
    s = jnp.exp(xs[0] - m)
    for c in range(1, num_classes):
        s = s + jnp.exp(xs[c] - m)
    lse = m + jnp.log(s)                                            # (ts, 128)

    # Gather target logit and per-pixel class weight via select chains (no one-hot reduce).
    # Padding lanes (t == -1) never match -> zero weight -> zero contribution.
    x_t = jnp.zeros_like(lse)
    w_t = jnp.zeros_like(lse)
    for c in range(num_classes):
        hit = t == c
        x_t = jnp.where(hit, xs[c], x_t)
        w_t = jnp.where(hit, w_ref[c], w_t)

    nll = lse - x_t
    num_c = jnp.where(valid, w_t * nll, 0.0)
    den_c = jnp.where(valid, w_t, 0.0)

    num_ref[...] += _fold_to_8x128(num_c, ts)
    den_ref[...] += _fold_to_8x128(den_c, ts)


# ----------------------------------------------------------------------------
# Wrapper
# ----------------------------------------------------------------------------
def balanced_ce_loss(output, target, weight, *, max_row_tile=2048):
    """output: (N, C, H, W) float logits; target: (N, H, W) int class indices;
    weight: (C,) class weights.  Returns the weighted-mean cross-entropy scalar."""
    N, C, H, W = output.shape
    P = H * W

    x = output                                   # keep caller dtype (bf16 halves HBM traffic)
    t = target
    if t.dtype != jnp.int32:
        t = t.astype(jnp.int32)

    # Contiguous (free) views — no transpose. Pad only if the pixel axis is not lane-aligned.
    x = x.reshape(N, C, P)
    t = t.reshape(N, P)
    Pp = _round_up(P, _LANES)
    if Pp != P:
        x = jnp.pad(x, ((0, 0), (0, 0), (0, Pp - P)))
        t = jnp.pad(t, ((0, 0), (0, Pp - P)), constant_values=-1)

    R = Pp // _LANES
    x = x.reshape(N, C, R, _LANES)
    t = t.reshape(N, R, _LANES)

    # Row tile: multiple of 8 sublanes whenever possible (full-R block for tiny inputs).
    if R >= _SUBLANES:
        ts = min(max_row_tile, (R // _SUBLANES) * _SUBLANES)
    else:
        ts = R
    n_row_tiles = pl.cdiv(R, ts)

    w = weight.reshape(C).astype(jnp.float32)

    kernel = functools.partial(_balanced_ce_kernel, num_classes=C, ts=ts, rows=R)

    bytes_accessed = (x.size * x.dtype.itemsize + t.size * 4
                      + 2 * N * _SUBLANES * _LANES * 4)

    num_p, den_p = pl.pallas_call(
        kernel,
        out_shape=(jax.ShapeDtypeStruct((N, _SUBLANES, _LANES), jnp.float32),
                   jax.ShapeDtypeStruct((N, _SUBLANES, _LANES), jnp.float32)),
        grid_spec=pltpu.PrefetchScalarGridSpec(
            num_scalar_prefetch=1,                       # class weights -> SMEM
            grid=(N, n_row_tiles),
            in_specs=[
                pl.BlockSpec((None, ts, _LANES), lambda n, j, w: (n, j, 0)),       # targets
                pl.BlockSpec((None, C, ts, _LANES), lambda n, j, w: (n, 0, j, 0)),  # logits
            ],
            out_specs=[
                pl.BlockSpec((None, _SUBLANES, _LANES), lambda n, j, w: (n, 0, 0)),  # num
                pl.BlockSpec((None, _SUBLANES, _LANES), lambda n, j, w: (n, 0, 0)),  # den
            ],
        ),
        compiler_params=pltpu.CompilerParams(
            dimension_semantics=("parallel", "arbitrary"),   # batch across cores, pixel reduce
            vmem_limit_bytes=32 * 1024 * 1024),
        cost_estimate=pl.CostEstimate(
            flops=12 * N * C * Pp,
            transcendentals=(C + 1) * N * Pp,
            bytes_accessed=bytes_accessed),
    )(w, t, x)

    # Tiny epilogue: sum partials (per batch element / per core) and divide once.
    # PyTorch CrossEntropyLoss(weight=...) with reduction='mean' divides by sum of weights.
    return jnp.sum(num_p) / jnp.sum(den_p)


# ----------------------------------------------------------------------------
# Module equivalent
# ----------------------------------------------------------------------------
def balanced_class_weights(target, num_classes=NUM_CLASSES, eps=EPS):
    """Mirrors BalancedBCELoss.__init__: weight[c] = 1 / (count(target == c) + eps).
    One-shot constructor work -> plain JAX (not in the forward hot path)."""
    t = target.reshape(-1)
    counts = jnp.stack([jnp.sum((t == c).astype(jnp.float32))
                        for c in range(num_classes)])
    return 1.0 / (counts + eps)


def make_balanced_bce_loss(init_target):
    """BalancedBCELoss(init_target) -> callable forward(output, target)."""
    weight = balanced_class_weights(init_target)

    def forward(output, target):
        return balanced_ce_loss(output, target, weight)

    return forward


# ----------------------------------------------------------------------------
# Reference (plain JAX) for a self-check
# ----------------------------------------------------------------------------
def _reference_loss(output, target, weight):
    N, C, H, W = output.shape
    x = jnp.transpose(output, (0, 2, 3, 1)).reshape(-1, C).astype(jnp.float32)
    t = target.reshape(-1)
    lse = jax.scipy.special.logsumexp(x, axis=-1)
    picked = jnp.take_along_axis(x, t[:, None], axis=-1)[:, 0]
    w = weight[t]
    return jnp.sum(w * (lse - picked)) / jnp.sum(w)


# ----------------------------------------------------------------------------
if __name__ == "__main__":
    key = jax.random.PRNGKey(0)
    k1, k2, k3, k4 = jax.random.split(key, 4)

    # criterion = BalancedBCELoss(labels); loss = criterion(logits, labels)
    N, C, H, W = 2, NUM_CLASSES, 16, 16
    logits = jax.random.normal(k1, (N, C, H, W), jnp.float32)
    labels = jax.random.randint(k2, (N, H, W), 0, C, dtype=jnp.int32)

    criterion = make_balanced_bce_loss(labels)
    loss = jax.block_until_ready(criterion(logits, labels))
    ref = jax.block_until_ready(
        _reference_loss(logits, labels, balanced_class_weights(labels)))
    assert loss.shape == ()
    assert bool(jnp.isfinite(loss))
    assert abs(float(loss) - float(ref)) <= 1e-4 * max(1.0, abs(float(ref)))

    # Non-lane-aligned spatial size: exercises the pad + in-kernel mask path.
    H2, W2 = 10, 10
    logits2 = jax.random.normal(k3, (N, C, H2, W2), jnp.float32)
    labels2 = jax.random.randint(k4, (N, H2, W2), 0, C, dtype=jnp.int32)
    criterion2 = make_balanced_bce_loss(labels2)
    loss2 = jax.block_until_ready(criterion2(logits2, labels2))
    ref2 = _reference_loss(logits2, labels2, balanced_class_weights(labels2))
    assert abs(float(loss2) - float(ref2)) <= 1e-4 * max(1.0, abs(float(ref2)))

    print("KERNEL_OK")
</pallas_src>

<mosaic_0001>
module attributes {stable_mosaic.version = 11 : i64} {
  func.func @_balanced_ce_kernel(%arg0: i32, %arg1: i32, %arg2: memref<4xf32, #tpu.memory_space<smem>>, %arg3: memref<1x2x128xi32, #tpu.memory_space<vmem>>, %arg4: memref<1x4x2x128xf32, #tpu.memory_space<vmem>>, %arg5: memref<1x8x128xf32, #tpu.memory_space<vmem>>, %arg6: memref<1x8x128xf32, #tpu.memory_space<vmem>>) attributes {dimension_semantics = [#tpu.dimension_semantics<parallel>, #tpu.dimension_semantics<arbitrary>], iteration_bounds = array<i64: 2, 1>, scalar_prefetch = 1 : i64, scratch_operands = 0 : i64, tpu.core_type = #tpu.core_type<tc>, window_params = [{transform_indices = @transform_0, window_bounds = array<i64: 1, 2, 128>}, {transform_indices = @transform_1, window_bounds = array<i64: 1, 4, 2, 128>}, {transform_indices = @transform_2, window_bounds = array<i64: 1, 8, 128>}, {transform_indices = @transform_3, window_bounds = array<i64: 1, 8, 128>}]} {
    %c0_i32 = arith.constant 0 : i32
    %0 = arith.cmpi eq, %arg1, %c0_i32 : i32
    %1 = arith.extui %0 : i1 to i32
    %c0_i32_0 = arith.constant 0 : i32
    %2 = arith.cmpi ne, %1, %c0_i32_0 : i32
    scf.if %2 {
      %cst_44 = arith.constant 0.000000e+00 : f32
      %97 = vector.broadcast %cst_44 : f32 to vector<8x128xf32>
      %c0_45 = arith.constant 0 : index
      %c0_46 = arith.constant 0 : index
      %c0_47 = arith.constant 0 : index
      %98 = vector.load %arg5[%c0_45, %c0_46, %c0_47] : memref<1x8x128xf32, #tpu.memory_space<vmem>>, vector<1x8x128xf32>
      %99 = vector.shape_cast %98 : vector<1x8x128xf32> to vector<8x128xf32>
      %100 = vector.shape_cast %97 : vector<8x128xf32> to vector<1x8x128xf32>
      tpu.vector_store %arg5[%c0_45, %c0_46, %c0_47], %100 {strides = array<i32>} : memref<1x8x128xf32, #tpu.memory_space<vmem>>, vector<1x8x128xf32>,
      %cst_48 = arith.constant 0.000000e+00 : f32
      %101 = vector.broadcast %cst_48 : f32 to vector<8x128xf32>
      %c0_49 = arith.constant 0 : index
      %c0_50 = arith.constant 0 : index
      %c0_51 = arith.constant 0 : index
      %102 = vector.load %arg6[%c0_49, %c0_50, %c0_51] : memref<1x8x128xf32, #tpu.memory_space<vmem>>, vector<1x8x128xf32>
      %103 = vector.shape_cast %102 : vector<1x8x128xf32> to vector<8x128xf32>
      %104 = vector.shape_cast %101 : vector<8x128xf32> to vector<1x8x128xf32>
      tpu.vector_store %arg6[%c0_49, %c0_50, %c0_51], %104 {strides = array<i32>} : memref<1x8x128xf32, #tpu.memory_space<vmem>>, vector<1x8x128xf32>,
    } else {
    }
    %c0 = arith.constant 0 : index
    %c0_1 = arith.constant 0 : index
    %c0_2 = arith.constant 0 : index
    %c0_3 = arith.constant 0 : index
    %3 = vector.load %arg4[%c0, %c0_1, %c0_2, %c0_3] : memref<1x4x2x128xf32, #tpu.memory_space<vmem>>, vector<1x1x2x128xf32>
    %4 = vector.shape_cast %3 : vector<1x1x2x128xf32> to vector<2x128xf32>
    %c0_4 = arith.constant 0 : index
    %c1 = arith.constant 1 : index
    %c0_5 = arith.constant 0 : index
    %c0_6 = arith.constant 0 : index
    %5 = vector.load %arg4[%c0_4, %c1, %c0_5, %c0_6] : memref<1x4x2x128xf32, #tpu.memory_space<vmem>>, vector<1x1x2x128xf32>
    %6 = vector.shape_cast %5 : vector<1x1x2x128xf32> to vector<2x128xf32>
    %c0_7 = arith.constant 0 : index
    %c2 = arith.constant 2 : index
    %c0_8 = arith.constant 0 : index
    %c0_9 = arith.constant 0 : index
    %7 = vector.load %arg4[%c0_7, %c2, %c0_8, %c0_9] : memref<1x4x2x128xf32, #tpu.memory_space<vmem>>, vector<1x1x2x128xf32>
    %8 = vector.shape_cast %7 : vector<1x1x2x128xf32> to vector<2x128xf32>
    %c0_10 = arith.constant 0 : index
    %c3 = arith.constant 3 : index
    %c0_11 = arith.constant 0 : index
    %c0_12 = arith.constant 0 : index
    %9 = vector.load %arg4[%c0_10, %c3, %c0_11, %c0_12] : memref<1x4x2x128xf32, #tpu.memory_space<vmem>>, vector<1x1x2x128xf32>
    %10 = vector.shape_cast %9 : vector<1x1x2x128xf32> to vector<2x128xf32>
    %c0_13 = arith.constant 0 : index
    %c0_14 = arith.constant 0 : index
    %c0_15 = arith.constant 0 : index
    %11 = vector.load %arg3[%c0_13, %c0_14, %c0_15] : memref<1x2x128xi32, #tpu.memory_space<vmem>>, vector<1x2x128xi32>
    %12 = vector.shape_cast %11 : vector<1x2x128xi32> to vector<2x128xi32>
    %c2_i32 = arith.constant 2 : i32
    %13 = arith.muli %arg1, %c2_i32 : i32
    %14 = tpu.iota {dimensions = array<i32: 0>} : vector<2x128xi32>
    %15 = vector.broadcast %13 : i32 to vector<2x128xi32>
    %16 = arith.addi %15, %14 : vector<2x128xi32>
    %c2_i32_16 = arith.constant 2 : i32
    %17 = vector.broadcast %c2_i32_16 : i32 to vector<2x128xi32>
    %18 = arith.cmpi slt, %16, %17 : vector<2x128xi32>
    %19 = arith.maximumf %4, %6 : vector<2x128xf32>
    %20 = arith.maximumf %19, %8 : vector<2x128xf32>
    %21 = arith.maximumf %20, %10 : vector<2x128xf32>
    %22 = arith.subf %4, %21 : vector<2x128xf32>
    %23 = math.exp %22 : vector<2x128xf32>
    %24 = arith.subf %6, %21 : vector<2x128xf32>
    %25 = math.exp %24 : vector<2x128xf32>
    %26 = arith.addf %23, %25 : vector<2x128xf32>
    %27 = arith.subf %8, %21 : vector<2x128xf32>
    %28 = math.exp %27 : vector<2x128xf32>
    %29 = arith.addf %26, %28 : vector<2x128xf32>
    %30 = arith.subf %10, %21 : vector<2x128xf32>
    %31 = math.exp %30 : vector<2x128xf32>
    %32 = arith.addf %29, %31 : vector<2x128xf32>
    %33 = math.log %32 : vector<2x128xf32>
    %34 = arith.addf %21, %33 : vector<2x128xf32>
    %cst = arith.constant 0.000000e+00 : f32
    %35 = vector.broadcast %cst : f32 to vector<2x128xf32>
    %cst_17 = arith.constant 0.000000e+00 : f32
    %36 = vector.broadcast %cst_17 : f32 to vector<2x128xf32>
    %c0_i32_18 = arith.constant 0 : i32
    %37 = vector.broadcast %c0_i32_18 : i32 to vector<2x128xi32>
    %38 = arith.cmpi eq, %12, %37 : vector<2x128xi32>
    %39 = arith.select %38, %4, %35 : vector<2x128xi1>, vector<2x128xf32>
    %c0_19 = arith.constant 0 : index
    %40 = memref.load %arg2[%c0_19] : memref<4xf32, #tpu.memory_space<smem>>
    %41 = vector.broadcast %40 : f32 to vector<2x128xf32>
    %42 = arith.select %38, %41, %36 : vector<2x128xi1>, vector<2x128xf32>
    %c1_i32 = arith.constant 1 : i32
    %43 = vector.broadcast %c1_i32 : i32 to vector<2x128xi32>
    %44 = arith.cmpi eq, %12, %43 : vector<2x128xi32>
    %45 = arith.select %44, %6, %39 : vector<2x128xi1>, vector<2x128xf32>
    %c1_20 = arith.constant 1 : index
    %46 = memref.load %arg2[%c1_20] : memref<4xf32, #tpu.memory_space<smem>>
    %47 = vector.broadcast %46 : f32 to vector<2x128xf32>
    %48 = arith.select %44, %47, %42 : vector<2x128xi1>, vector<2x128xf32>
    %c2_i32_21 = arith.constant 2 : i32
    %49 = vector.broadcast %c2_i32_21 : i32 to vector<2x128xi32>
    %50 = arith.cmpi eq, %12, %49 : vector<2x128xi32>
    %51 = arith.select %50, %8, %45 : vector<2x128xi1>, vector<2x128xf32>
    %c2_22 = arith.constant 2 : index
    %52 = memref.load %arg2[%c2_22] : memref<4xf32, #tpu.memory_space<smem>>
    %53 = vector.broadcast %52 : f32 to vector<2x128xf32>
    %54 = arith.select %50, %53, %48 : vector<2x128xi1>, vector<2x128xf32>
    %c3_i32 = arith.constant 3 : i32
    %55 = vector.broadcast %c3_i32 : i32 to vector<2x128xi32>
    %56 = arith.cmpi eq, %12, %55 : vector<2x128xi32>
    %57 = arith.select %56, %10, %51 : vector<2x128xi1>, vector<2x128xf32>
    %c3_23 = arith.constant 3 : index
    %58 = memref.load %arg2[%c3_23] : memref<4xf32, #tpu.memory_space<smem>>
    %59 = vector.broadcast %58 : f32 to vector<2x128xf32>
    %60 = arith.select %56, %59, %54 : vector<2x128xi1>, vector<2x128xf32>
    %61 = arith.subf %34, %57 : vector<2x128xf32>
    %62 = arith.mulf %60, %61 : vector<2x128xf32>
    %cst_24 = arith.constant 0.000000e+00 : f32
    %63 = vector.broadcast %cst_24 : f32 to vector<2x128xf32>
    %64 = arith.select %18, %62, %63 : vector<2x128xi1>, vector<2x128xf32>
    %cst_25 = arith.constant 0.000000e+00 : f32
    %65 = vector.broadcast %cst_25 : f32 to vector<2x128xf32>
    %66 = arith.select %18, %60, %65 : vector<2x128xi1>, vector<2x128xf32>
    %c0_26 = arith.constant 0 : index
    %c0_27 = arith.constant 0 : index
    %c0_28 = arith.constant 0 : index
    %67 = vector.load %arg5[%c0_26, %c0_27, %c0_28] : memref<1x8x128xf32, #tpu.memory_space<vmem>>, vector<1x8x128xf32>
    %68 = vector.shape_cast %67 : vector<1x8x128xf32> to vector<8x128xf32>
    %cst_29 = arith.constant dense<0.000000e+00> : vector<128xf32>
    %69 = vector.multi_reduction <add>, %64, %cst_29 [0] : vector<2x128xf32> to vector<128xf32>
    %70 = vector.shape_cast %69 : vector<128xf32> to vector<1x128xf32>
    %71 = tpu.iota {dimensions = array<i32: 0>} : vector<8x128xi32>
    %c0_i32_30 = arith.constant 0 : i32
    %72 = vector.broadcast %c0_i32_30 : i32 to vector<8x128xi32>
    %73 = arith.cmpi eq, %71, %72 : vector<8x128xi32>
    %74 = vector.shape_cast %70 : vector<1x128xf32> to vector<1x128xf32>
    %75 = vector.broadcast %74 : vector<1x128xf32> to vector<8x128xf32>
    %cst_31 = arith.constant 0.000000e+00 : f32
    %76 = vector.broadcast %cst_31 : f32 to vector<8x128xf32>
    %77 = arith.select %73, %75, %76 : vector<8x128xi1>, vector<8x128xf32>
    %78 = arith.addf %68, %77 : vector<8x128xf32>
    %c0_32 = arith.constant 0 : index
    %c0_33 = arith.constant 0 : index
    %c0_34 = arith.constant 0 : index
    %79 = vector.load %arg5[%c0_32, %c0_33, %c0_34] : memref<1x8x128xf32, #tpu.memory_space<vmem>>, vector<1x8x128xf32>
    %80 = vector.shape_cast %79 : vector<1x8x128xf32> to vector<8x128xf32>
    %81 = vector.shape_cast %78 : vector<8x128xf32> to vector<1x8x128xf32>
    tpu.vector_store %arg5[%c0_32, %c0_33, %c0_34], %81 {strides = array<i32>} : memref<1x8x128xf32, #tpu.memory_space<vmem>>, vector<1x8x128xf32>,
    %c0_35 = arith.constant 0 : index
    %c0_36 = arith.constant 0 : index
    %c0_37 = arith.constant 0 : index
    %82 = vector.load %arg6[%c0_35, %c0_36, %c0_37] : memref<1x8x128xf32, #tpu.memory_space<vmem>>, vector<1x8x128xf32>
    %83 = vector.shape_cast %82 : vector<1x8x128xf32> to vector<8x128xf32>
    %cst_38 = arith.constant dense<0.000000e+00> : vector<128xf32>
    %84 = vector.multi_reduction <add>, %66, %cst_38 [0] : vector<2x128xf32> to vector<128xf32>
    %85 = vector.shape_cast %84 : vector<128xf32> to vector<1x128xf32>
    %86 = tpu.iota {dimensions = array<i32: 0>} : vector<8x128xi32>
    %c0_i32_39 = arith.constant 0 : i32
    %87 = vector.broadcast %c0_i32_39 : i32 to vector<8x128xi32>
    %88 = arith.cmpi eq, %86, %87 : vector<8x128xi32>
    %89 = vector.shape_cast %85 : vector<1x128xf32> to vector<1x128xf32>
    %90 = vector.broadcast %89 : vector<1x128xf32> to vector<8x128xf32>
    %cst_40 = arith.constant 0.000000e+00 : f32
    %91 = vector.broadcast %cst_40 : f32 to vector<8x128xf32>
    %92 = arith.select %88, %90, %91 : vector<8x128xi1>, vector<8x128xf32>
    %93 = arith.addf %83, %92 : vector<8x128xf32>
    %c0_41 = arith.constant 0 : index
    %c0_42 = arith.constant 0 : index
    %c0_43 = arith.constant 0 : index
    %94 = vector.load %arg6[%c0_41, %c0_42, %c0_43] : memref<1x8x128xf32, #tpu.memory_space<vmem>>, vector<1x8x128xf32>
    %95 = vector.shape_cast %94 : vector<1x8x128xf32> to vector<8x128xf32>
    %96 = vector.shape_cast %93 : vector<8x128xf32> to vector<1x8x128xf32>
    tpu.vector_store %arg6[%c0_41, %c0_42, %c0_43], %96 {strides = array<i32>} : memref<1x8x128xf32, #tpu.memory_space<vmem>>, vector<1x8x128xf32>,
    return
  }
  func.func @transform_0(%arg0: i32, %arg1: i32, %arg2: memref<4xf32, #tpu.memory_space<smem>>) -> (i32, i32, i32) {
    %c0_i32 = arith.constant 0 : i32
    %c0_i32_0 = arith.constant 0 : i32
    return %arg0, %arg1, %c0_i32 : i32, i32, i32
  }
  func.func @transform_1(%arg0: i32, %arg1: i32, %arg2: memref<4xf32, #tpu.memory_space<smem>>) -> (i32, i32, i32, i32) {
    %c0_i32 = arith.constant 0 : i32
    %c0_i32_0 = arith.constant 0 : i32
    %c0_i32_1 = arith.constant 0 : i32
    return %arg0, %c0_i32, %arg1, %c0_i32_0 : i32, i32, i32, i32
  }
  func.func @transform_2(%arg0: i32, %arg1: i32, %arg2: memref<4xf32, #tpu.memory_space<smem>>) -> (i32, i32, i32) {
    %c0_i32 = arith.constant 0 : i32
    %c0_i32_0 = arith.constant 0 : i32
    %c0_i32_1 = arith.constant 0 : i32
    return %arg0, %c0_i32, %c0_i32_0 : i32, i32, i32
  }
  func.func @transform_3(%arg0: i32, %arg1: i32, %arg2: memref<4xf32, #tpu.memory_space<smem>>) -> (i32, i32, i32) {
    %c0_i32 = arith.constant 0 : i32
    %c0_i32_0 = arith.constant 0 : i32
    %c0_i32_1 = arith.constant 0 : i32
    return %arg0, %c0_i32, %c0_i32_0 : i32, i32, i32
  }
}

</mosaic_0001>

<llo_original>
// kernel: tpu_custom_call.1
$region0: #{tpu_custom_call.1}
  #allocation0 [shape = 'u32[]', space=smem, size = 0x4, offset = 0x4, fixed_abs, tag = 'smem constant byte address 0x4 - core index']
  #allocation1 [shape = 'u32[72,128]{1,0:T(1,128)}', space=vmem, size = 0x9000, scoped, tag = 'internal scratch']
  #allocation2 [shape = 's32[1]{0}', space=sflag, size = 0x4, scoped, tag = 'scoped memory for tpu_custom_call.1']
  #allocation3 [shape = 'u8[512]{0}', space=smem, size = 0x200, scoped, tag = 'prefetched SMEM operand 0']
  %s0 = inlined_call_operand.hbm [shape: f32[4], index: 0, kind: input, shape index: {}]
  %s1 = inlined_call_operand.hbm [shape: s32[2,2,128], index: 1, kind: input, shape index: {}]
  %s2 = inlined_call_operand.hbm [shape: f32[2,4,2,128], index: 2, kind: input, shape index: {}]
  %s3 = inlined_call_operand.hbm [shape: f32[2,8,128], index: 3, kind: output, shape index: {0}]
  %s4 = inlined_call_operand.hbm [shape: f32[2,8,128], index: 4, kind: output, shape index: {1}]
  %5 = xla_tuple %s3, %s4
  %s6 = sld [smem:[#allocation0]]
  $region61: #{tpu_custom_call.1} parent=0
    _
  %s8 = ssub.s32 1, %s6
  %s9 = scalar_select 0, %s8, %s6
  %s11 = sshll.u32 %s0, 4
  %s12 = int_to_ptr.hbm [resolvable:$true] %s11
  %14 = dma.hbm_to_smem %s12, 16, [#allocation3], [#allocation2]
  %16 = dma.done [#allocation2], 16
  %17 = sfence
  $region1: #{tpu_custom_call.1} parent=0
    #allocation4 [shape = 'u8[2048]{0}', space=vmem, size = 0x800, scoped, tag = 'input window, operand 1']
    #allocation5 [shape = 's32[2]{0}', space=sflag, size = 0x8, scoped, tag = 'scoped memory for tpu_custom_call.1']
    #allocation6 [shape = 's32[2]{0}', space=sflag, size = 0x8, scoped, tag = 'scoped memory for tpu_custom_call.1']
    #allocation7 [shape = 'u8[8192]{0}', space=vmem, size = 0x2000, scoped, tag = 'input window, operand 2']
    #allocation8 [shape = 's32[2]{0}', space=sflag, size = 0x8, scoped, tag = 'scoped memory for tpu_custom_call.1']
    #allocation9 [shape = 'u8[8192]{0}', space=vmem, size = 0x2000, scoped, tag = 'output window, operand 0']
    #allocation10 [shape = 'u8[8192]{0}', space=vmem, size = 0x2000, scoped, tag = 'output window, operand 1']
    #allocation11 [shape = 's32[2]{0}', space=sflag, size = 0x8, scoped, tag = 'scoped memory for tpu_custom_call.1']
    %18 = vsyncpa [#allocation5], 0
    %s19 = scalar_lea.sflag [#allocation5], 1
    %20 = vsyncpa %s19, 0
    %21 = vsyncpa [#allocation8], 0
    %s22 = scalar_lea.sflag [#allocation8], 1
    %23 = vsyncpa %s22, 0
    %24 = vsyncpa [#allocation6], 0
    %s25 = scalar_lea.sflag [#allocation6], 1
    %26 = vsyncpa %s25, 0
    %27 = vsyncpa [#allocation11], 0
    %s28 = scalar_lea.sflag [#allocation11], 1
    %29 = vsyncpa %s28, 0
    loop: start=0, step=1, limit=4
    $region2: #{tpu_custom_call.1} parent=1 // loop_pre_header
      _
    $region3: #{tpu_custom_call.1} parent=1 // loop_header
      %s31 = sphi 0, %s35
      %p32 = scmp.ge.s32.totalorder %s31, 4
      %s38 = sphi 0, %s50
      %s39 = sphi 0, %s46
      %s40 = sphi 0, %s38
      %s41 = sphi 0, %s39
      %s42 = sphi 0, %s40
      %s43 = sphi 0, %s41
      %s55 = sphi 0, %s57
      %s58 = sphi 0, %s55
      %s59 = sphi 0, %s58
      %s75 = sphi 0, %s59
      %s83 = sphi 0, %s85
      %s86 = sphi 0, %s83
      %s87 = sphi 0, %s86
      %s103 = sphi 0, %s87
      %s109 = sphi 0, %s111
      %s112 = sphi 0, %s109
      %s113 = sphi 0, %s112
      %s129 = sphi 0, %s113
      %s135 = sphi 0, %s137
      %s138 = sphi 0, %s135
      %s139 = sphi 0, %s138
      %s155 = sphi 0, %s139
    $region4: #{tpu_custom_call.1} parent=1 // loop_header_branch
      %34 = sbr.rel (%p32) target = $region8
    $region5: #{tpu_custom_call.1} parent=1 // loop_body
      %s36 = ssub.s32 %s31, 1
      %s37 = ssub.s32 %s31, 2
      %s44 = sadd.s32 1, %s39
      %p45 = scmp.ge.s32.totalorder %s44, 1
      %s46 = scalar_select %p45, 0, %s44
      %s47 = sadd.s32 1, %s38
      %s48 = scalar_select %p45, %s47, %s38
      %p49 = scmp.ge.s32.totalorder %s48, 2
      %s50 = scalar_select %p49, 0, %s48
      %s51 = ssub.s32 %s38, %s50
      %s52 = ssub.s32 %s39, %s46
      %s53 = sor.u32 %s51, %s52
      %p54 = scmp.eq.s32.totalorder %s53, 0
      %s56 = sadd.s32 %s55, 1
      %s57 = scalar_select %p54, %s55, %s56
      %p60 = pneg %p54
      %p61 = scmp.eq.s32.totalorder %s31, 1
      %p62 = por %p60, %p61
      %p63 = scmp.ne.s32.totalorder %s55, %s58
      %p64 = scmp.eq.s32.totalorder %s31, 0
      %p65 = por %p63, %p64
      %p66 = scmp.ne.s32.totalorder %s55, %s58
      %p67 = scmp.eq.s32.totalorder %s36, 1
      %p68 = por %p66, %p67
      %p69 = scmp.ne.s32.totalorder %s58, %s59
      %p70 = scmp.eq.s32.totalorder %s36, 0
      %p71 = por %p69, %p70
      %p72 = scmp.ne.s32.totalorder %s58, %s59
      %p73 = scmp.eq.s32.totalorder %s37, 1
      %p74 = por %p72, %p73
      %p76 = scmp.ne.s32.totalorder %s59, %s75
      %p77 = scmp.eq.s32.totalorder %s37, 0
      %p78 = por %p76, %p77
      %s79 = ssub.s32 %s38, %s50
      %s80 = ssub.s32 %s39, %s46
      %s81 = sor.u32 %s79, %s80
      %p82 = scmp.eq.s32.totalorder %s81, 0
      %s84 = sadd.s32 %s83, 1
      %s85 = scalar_select %p82, %s83, %s84
      %p88 = pneg %p82
      %p89 = scmp.eq.s32.totalorder %s31, 1
      %p90 = por %p88, %p89
      %p91 = scmp.ne.s32.totalorder %s83, %s86
      %p92 = scmp.eq.s32.totalorder %s31, 0
      %p93 = por %p91, %p92
      %p94 = scmp.ne.s32.totalorder %s83, %s86
      %p95 = scmp.eq.s32.totalorder %s36, 1
      %p96 = por %p94, %p95
      %p97 = scmp.ne.s32.totalorder %s86, %s87
      %p98 = scmp.eq.s32.totalorder %s36, 0
      %p99 = por %p97, %p98
      %p100 = scmp.ne.s32.totalorder %s86, %s87
      %p101 = scmp.eq.s32.totalorder %s37, 1
      %p102 = por %p100, %p101
      %p104 = scmp.ne.s32.totalorder %s87, %s103
      %p105 = scmp.eq.s32.totalorder %s37, 0
      %p106 = por %p104, %p105
      %s107 = ssub.s32 %s38, %s50
      %p108 = scmp.eq.s32.totalorder %s107, 0
      %s110 = sadd.s32 %s109, 1
      %s111 = scalar_select %p108, %s109, %s110
      %p114 = pneg %p108
      %p115 = scmp.eq.s32.totalorder %s31, 1
      %p116 = por %p114, %p115
      %p117 = scmp.ne.s32.totalorder %s109, %s112
      %p118 = scmp.eq.s32.totalorder %s31, 0
      %p119 = por %p117, %p118
      %p120 = scmp.ne.s32.totalorder %s109, %s112
      %p121 = scmp.eq.s32.totalorder %s36, 1
      %p122 = por %p120, %p121
      %p123 = scmp.ne.s32.totalorder %s112, %s113
      %p124 = scmp.eq.s32.totalorder %s36, 0
      %p125 = por %p123, %p124
      %p126 = scmp.ne.s32.totalorder %s112, %s113
      %p127 = scmp.eq.s32.totalorder %s37, 1
      %p128 = por %p126, %p127
      %p130 = scmp.ne.s32.totalorder %s113, %s129
      %p131 = scmp.eq.s32.totalorder %s37, 0
      %p132 = por %p130, %p131
      %s133 = ssub.s32 %s38, %s50
      %p134 = scmp.eq.s32.totalorder %s133, 0
      %s136 = sadd.s32 %s135, 1
      %s137 = scalar_select %p134, %s135, %s136
      %p140 = pneg %p134
      %p141 = scmp.eq.s32.totalorder %s31, 1
      %p142 = por %p140, %p141
      %p143 = scmp.ne.s32.totalorder %s135, %s138
      %p144 = scmp.eq.s32.totalorder %s31, 0
      %p145 = por %p143, %p144
      %p146 = scmp.ne.s32.totalorder %s135, %s138
      %p147 = scmp.eq.s32.totalorder %s36, 1
      %p148 = por %p146, %p147
      %p149 = scmp.ne.s32.totalorder %s138, %s139
      %p150 = scmp.eq.s32.totalorder %s36, 0
      %p151 = por %p149, %p150
      %p152 = scmp.ne.s32.totalorder %s138, %s139
      %p153 = scmp.eq.s32.totalorder %s37, 1
      %p154 = por %p152, %p153
      %p156 = scmp.ne.s32.totalorder %s139, %s155
      %p157 = scmp.eq.s32.totalorder %s37, 0
      %p158 = por %p156, %p157
      %p159 = scmp.le.s32.totalorder 1, %s31
      %p160 = scmp.lt.s32.totalorder %s31, 3
      %p161 = pnand %p159, %p160
      %p162 = pneg %p161
      // Predicated region
      $region9: #{tpu_custom_call.1} parent=5 // pred_check
        _
      $region10: #{tpu_custom_call.1} parent=5 // pred_check_branch
        %164 = sbr.rel (%p161) target = $region12
      $region11: #{tpu_custom_call.1} parent=5 // pred_region
        %s165 = ssub.s32 %s31, 1
      $region12: #{tpu_custom_call.1} parent=5 // pred_fallthru
        _
      %p166 = scmp.lt.s32.totalorder %s31, 2
      // Predicated region
      $region13: #{tpu_custom_call.1} parent=5 // pred_check
        %p167 = pneg %p166
      $region14: #{tpu_custom_call.1} parent=5 // pred_check_branch
        %169 = sbr.rel (%p167) target = $region16
      $region15: #{tpu_custom_call.1} parent=5 // pred_region
        // Predicated region
        $region17: #{tpu_custom_call.1} parent=15 // pred_check
          %p170 = pneg %p65
        $region18: #{tpu_custom_call.1} parent=15 // pred_check_branch
          %172 = sbr.rel (%p170) target = $region20
        $region19: #{tpu_custom_call.1} parent=15 // pred_region
          %s173 = sand.u32 %s55, 1
          %s174 = scalar_lea.sflag [#allocation5], %s173
          %s175 = sand.u32 %s55, 1
          %s176 = smul.addr %s175, 2
          %s177 = scalar_lea.vmem [#allocation4], %s176
          %179 = vsyncadd %s174, 0
          %s180 = sadd.s32 %s39, %s38
          %s181 = smul.addr %s180, 2
          %s182 = scalar_lea.hbm %s1, %s181
          %s184 = sshll.u32 %s182, 4
          %s185 = int_to_ptr.hbm [resolvable:$true] %s184
          %s186 = sshll.u32 %s177, 4
          %s187 = int_to_ptr.vmem [resolvable:$true] %s186
          %189 = dma.hbm_to_vmem [thread:$0]  %s185, 32, %s187, %s174
        $region20: #{tpu_custom_call.1} parent=15 // pred_fallthru
          _
        // Predicated region
        $region21: #{tpu_custom_call.1} parent=15 // pred_check
          %p190 = pneg %p93
        $region22: #{tpu_custom_call.1} parent=15 // pred_check_branch
          %192 = sbr.rel (%p190) target = $region24
        $region23: #{tpu_custom_call.1} parent=15 // pred_region
          %s193 = sand.u32 %s83, 1
          %s194 = scalar_lea.sflag [#allocation8], %s193
          %s195 = sand.u32 %s83, 1
          %s196 = smul.addr %s195, 8
          %s197 = scalar_lea.vmem [#allocation7], %s196
          %199 = vsyncadd %s194, 0
          %s200 = smul.addr %s38, 4
          %s201 = sadd.s32 %s39, %s200
          %s202 = smul.addr %s201, 2
          %s203 = scalar_lea.hbm %s2, %s202
          %s204 = sshll.u32 %s203, 4
          %s205 = int_to_ptr.hbm [resolvable:$true] %s204
          %s206 = sshll.u32 %s197, 4
          %s207 = int_to_ptr.vmem [resolvable:$true] %s206
          %212 = dma.hbm_to_vmem [thread:$0]  %s205, 128, %s207, %s194, 32, 32, 2
        $region24: #{tpu_custom_call.1} parent=15 // pred_fallthru
          _
      $region16: #{tpu_custom_call.1} parent=5 // pred_fallthru
        _
      %p213 = scmp.le.s32.totalorder 1, %s31
      %p214 = scmp.lt.s32.totalorder %s31, 3
      %p215 = pnand %p213, %p214
      %p216 = pneg %p215
      // Predicated region
      $region25: #{tpu_custom_call.1} parent=5 // pred_check
        _
      $region26: #{tpu_custom_call.1} parent=5 // pred_check_branch
        %218 = sbr.rel (%p215) target = $region28
      $region27: #{tpu_custom_call.1} parent=5 // pred_region
        %s219 = ssub.s32 %s31, 1
        %s220 = sand.u32 %s58, 1
        %s221 = scalar_lea.sflag [#allocation5], %s220
        %s222 = sand.u32 %s58, 1
        %s223 = smul.addr %s222, 2
        %s224 = scalar_lea.vmem [#allocation4], %s223
        // Predicated region
        $region29: #{tpu_custom_call.1} parent=27 // pred_check
          %p225 = pneg %p71
        $region30: #{tpu_custom_call.1} parent=27 // pred_check_branch
          %227 = sbr.rel (%p225) target = $region32
        $region31: #{tpu_custom_call.1} parent=27 // pred_region
          %229 = dma.done %s221, 32
        $region32: #{tpu_custom_call.1} parent=27 // pred_fallthru
          _
        %s230 = sand.u32 %s86, 1
        %s231 = scalar_lea.sflag [#allocation8], %s230
        %s232 = sand.u32 %s86, 1
        %s233 = smul.addr %s232, 8
        %s234 = scalar_lea.vmem [#allocation7], %s233
        // Predicated region
        $region33: #{tpu_custom_call.1} parent=27 // pred_check
          %p235 = pneg %p99
        $region34: #{tpu_custom_call.1} parent=27 // pred_check_branch
          %237 = sbr.rel (%p235) target = $region36
        $region35: #{tpu_custom_call.1} parent=27 // pred_region
          %239 = dma.done %s231, 128
        $region36: #{tpu_custom_call.1} parent=27 // pred_fallthru
          _
        %s240 = sand.u32 %s58, 1
        %s241 = scalar_lea.sflag [#allocation5], %s240
        %s242 = sand.u32 %s58, 1
        %s243 = smul.addr %s242, 2
        %s244 = scalar_lea.vmem [#allocation4], %s243
        %p245 = pneg %p71
        %p246 = pneg %p68
        %s247 = sand.u32 %s86, 1
        %s248 = scalar_lea.sflag [#allocation8], %s247
        %s249 = sand.u32 %s86, 1
        %s250 = smul.addr %s249, 8
        %s251 = scalar_lea.vmem [#allocation7], %s250
        %p252 = pneg %p99
        %p253 = pneg %p96
        %p254 = pneg %p125
        %p255 = pneg %p122
        %s256 = sand.u32 %s112, 1
        %s257 = scalar_lea.sflag [#allocation6], %s256
        %s258 = sand.u32 %s112, 1
        %s259 = smul.addr %s258, 8
        %s260 = scalar_lea.vmem [#allocation9], %s259
        %p261 = pneg %p151
        %p262 = pneg %p148
        %s263 = sand.u32 %s138, 1
        %s264 = scalar_lea.sflag [#allocation11], %s263
        %s265 = sand.u32 %s138, 1
        %s266 = smul.addr %s265, 8
        %s267 = scalar_lea.vmem [#allocation10], %s266
        %p268 = scmp.eq.s32.totalorder %s41, 0
        // Predicated region
        $region37: #{tpu_custom_call.1} parent=27 // pred_check
          %p269 = pneg %p268
        $region38: #{tpu_custom_call.1} parent=27 // pred_check_branch
          %271 = sbr.rel (%p269) target = $region40
        $region39: #{tpu_custom_call.1} parent=27 // pred_region
          %272 = vst [vmem:[%s260] sm:$0xff] 0.0
          %273 = vst [vmem:[%s267] sm:$0xff] 0.0
        $region40: #{tpu_custom_call.1} parent=27 // pred_fallthru
          _
        %v274 = vld [vmem:[%s234] sm:$0x3]
        %s275 = scalar_lea.vmem %s234, 2 [#allocation7]
        %v276 = vld [vmem:[%s275] sm:$0x3]
        %s277 = scalar_lea.vmem %s234, 4 [#allocation7]
        %v278 = vld [vmem:[%s277] sm:$0x3]
        %s279 = scalar_lea.vmem %s234, 6 [#allocation7]
        %v280 = vld [vmem:[%s279] sm:$0x3]
        %v281 = vld [vmem:[%s224] sm:$0x3]
        %s282 = smul.u32 %s41, 2
        %v283 = vlaneseq
        %v284 = vshrl.u32 %v283, 7
        %v285 = vstv %s282
        %v286 = vadd.s32 %v285, %v284
        %vm287 = vcmp.lt.s32.totalorder %v286, 2
        %v288 = vmax.f32 %v274, %v276
        %v289 = vmax.f32 %v288, %v278
        %v290 = vmax.f32 %v289, %v280
        %v291 = vsub.f32 %v274, %v290
        %v292 = vmul.f32 %v291, 1.442695
        %v293 = vpow.pop %v292
        %v294 = vsub.f32 %v276, %v290
        %v295 = vmul.f32 %v294, 1.442695
        %v296 = vpow.pop %v295
        %v297 = vadd.f32 %v293, %v296
        %v298 = vsub.f32 %v278, %v290
        %v299 = vmul.f32 %v298, 1.442695
        %v300 = vpow.pop %v299
        %v301 = vadd.f32 %v297, %v300
        %v302 = vsub.f32 %v280, %v290
        %v303 = vmul.f32 %v302, 1.442695
        %v304 = vpow.pop %v303
        %v305 = vadd.f32 %v301, %v304
        %v306 = vlog2.pop %v305
        %v307 = vmul.f32 %v306, 0.6931472
        %v308 = vadd.f32 %v290, %v307
        %vm309 = vcmp.eq.s32.totalorder %v281, 0
        %v310 = vsel %vm309, %v274, 0.0
        %s311 = sld [smem:[#allocation3]]
        %v312 = vstv %s311
        %v313 = vsel %vm309, %v312, 0.0
        %vm314 = vcmp.eq.s32.totalorder %v281, 1
        %v315 = vsel %vm314, %v276, %v310
        %s316 = sld [smem:[#allocation3 + $0x1]]
        %v317 = vstv %s316
        %v318 = vsel %vm314, %v317, %v313
        %vm319 = vcmp.eq.s32.totalorder %v281, 2
        %v320 = vsel %vm319, %v278, %v315
        %s321 = sld [smem:[#allocation3 + $0x2]]
        %v322 = vstv %s321
        %v323 = vsel %vm319, %v322, %v318
        %vm324 = vcmp.eq.s32.totalorder %v281, 3
        %v325 = vsel %vm324, %v280, %v320
        %s326 = sld [smem:[#allocation3 + $0x3]]
        %v327 = vstv %s326
        %v328 = vsel %vm324, %v327, %v323
        %v329 = vsub.f32 %v308, %v325
        %v330 = vmul.f32 %v328, %v329
        %v331 = vsel %vm287, %v330, 0.0
        %v332 = vsel %vm287, %v328, 0.0
        %v333 = vld [vmem:[%s260] sm:$0xff]
        %vm334 = vcmask 1041408
        %v335 = vsel %vm334, %v331, 0.0
        %v336 = vrot.slane %v335, 4
        %v337 = vadd.f32 %v335, %v336
        %v338 = vrot.slane %v337, 2
        %v339 = vadd.f32 %v337, %v338
        %v340 = vrot.slane %v339, 1
        %v341 = vadd.f32 %v339, %v340
        %vm342 = vcmp.eq.s32.totalorder %v284, 0
        %v343 = vsel %vm342, %v341, 0.0
        %v344 = vadd.f32 %v333, %v343
        %345 = vst [vmem:[%s260] sm:$0xff] %v344
        %v346 = vld [vmem:[%s267] sm:$0xff]
        %v347 = vsel %vm334, %v332, 0.0
        %v348 = vrot.slane %v347, 4
        %v349 = vadd.f32 %v347, %v348
        %v350 = vrot.slane %v349, 2
        %v351 = vadd.f32 %v349, %v350
        %v352 = vrot.slane %v351, 1
        %v353 = vadd.f32 %v351, %v352
        %v354 = vsel %vm342, %v353, 0.0
        %v355 = vadd.f32 %v346, %v354
        %356 = vst [vmem:[%s267] sm:$0xff] %v355
        %s357 = sand.u32 %s112, 1
        %s358 = scalar_lea.sflag [#allocation6], %s357
        %s359 = sand.u32 %s112, 1
        %s360 = smul.addr %s359, 8
        %s361 = scalar_lea.vmem [#allocation9], %s360
        %s362 = sand.u32 %s138, 1
        %s363 = scalar_lea.sflag [#allocation11], %s362
        %s364 = sand.u32 %s138, 1
        %s365 = smul.addr %s364, 8
        %s366 = scalar_lea.vmem [#allocation10], %s365
        // Predicated region
        $region41: #{tpu_custom_call.1} parent=27 // pred_check
          %p367 = pneg %p122
        $region42: #{tpu_custom_call.1} parent=27 // pred_check_branch
          %369 = sbr.rel (%p367) target = $region44
        $region43: #{tpu_custom_call.1} parent=27 // pred_region
          %371 = vsyncadd %s358, 0
          %s372 = smul.addr %s40, 8
          %s373 = scalar_lea.hbm %s3, %s372
          %s375 = sshll.u32 %s361, 4
          %s376 = int_to_ptr.vmem [resolvable:$true] %s375
          %s377 = sshll.u32 %s373, 4
          %s378 = int_to_ptr.hbm [resolvable:$true] %s377
          %380 = dma.vmem_to_hbm [thread:$0]  %s376, 128, %s378, %s358
        $region44: #{tpu_custom_call.1} parent=27 // pred_fallthru
          _
        // Predicated region
        $region45: #{tpu_custom_call.1} parent=27 // pred_check
          %p381 = pneg %p148
        $region46: #{tpu_custom_call.1} parent=27 // pred_check_branch
          %383 = sbr.rel (%p381) target = $region48
        $region47: #{tpu_custom_call.1} parent=27 // pred_region
          %385 = vsyncadd %s363, 0
          %s386 = smul.addr %s40, 8
          %s387 = scalar_lea.hbm %s4, %s386
          %s389 = sshll.u32 %s366, 4
          %s390 = int_to_ptr.vmem [resolvable:$true] %s389
          %s391 = sshll.u32 %s387, 4
          %s392 = int_to_ptr.hbm [resolvable:$true] %s391
          %394 = dma.vmem_to_hbm [thread:$0]  %s390, 128, %s392, %s363
        $region48: #{tpu_custom_call.1} parent=27 // pred_fallthru
          _
      $region28: #{tpu_custom_call.1} parent=5 // pred_fallthru
        _
      %p395 = scmp.le.s32.totalorder 2, %s31
      // Predicated region
      $region49: #{tpu_custom_call.1} parent=5 // pred_check
        %p396 = pneg %p395
      $region50: #{tpu_custom_call.1} parent=5 // pred_check_branch
        %398 = sbr.rel (%p396) target = $region52
      $region51: #{tpu_custom_call.1} parent=5 // pred_region
        %s399 = ssub.s32 %s31, 2
        // Predicated region
        $region53: #{tpu_custom_call.1} parent=51 // pred_check
          %p400 = pneg %p128
        $region54: #{tpu_custom_call.1} parent=51 // pred_check_branch
          %402 = sbr.rel (%p400) target = $region56
        $region55: #{tpu_custom_call.1} parent=51 // pred_region
          %s403 = sand.u32 %s113, 1
          %s404 = scalar_lea.sflag [#allocation6], %s403
          %s405 = sand.u32 %s113, 1
          %s406 = smul.addr %s405, 8
          %s407 = scalar_lea.vmem [#allocation9], %s406
          %409 = dma.done %s404, 128
        $region56: #{tpu_custom_call.1} parent=51 // pred_fallthru
          _
        // Predicated region
        $region57: #{tpu_custom_call.1} parent=51 // pred_check
          %p410 = pneg %p154
        $region58: #{tpu_custom_call.1} parent=51 // pred_check_branch
          %412 = sbr.rel (%p410) target = $region60
        $region59: #{tpu_custom_call.1} parent=51 // pred_region
          %s413 = sand.u32 %s139, 1
          %s414 = scalar_lea.sflag [#allocation11], %s413
          %s415 = sand.u32 %s139, 1
          %s416 = smul.addr %s415, 8
          %s417 = scalar_lea.vmem [#allocation10], %s416
          %419 = dma.done %s414, 128
        $region60: #{tpu_custom_call.1} parent=51 // pred_fallthru
          _
      $region52: #{tpu_custom_call.1} parent=5 // pred_fallthru
        _
    $region6: #{tpu_custom_call.1} parent=1 // loop_footer
      %s35 = sadd.s32 1, %s31
    $region7: #{tpu_custom_call.1} parent=1 // loop_footer_branch
      %30 = sbr.rel target = $region3
    $region8: #{tpu_custom_call.1} parent=1 // loop_exit
      _
    %420 = vsyncpa [#allocation5], 1
    %s421 = scalar_lea.sflag [#allocation5], 1
    %422 = vsyncpa %s421, 1
    %423 = vsyncpa [#allocation8], 1
    %s424 = scalar_lea.sflag [#allocation8], 1
    %425 = vsyncpa %s424, 1
    %426 = vsyncpa [#allocation6], 1
    %s427 = scalar_lea.sflag [#allocation6], 1
    %428 = vsyncpa %s427, 1
    %429 = vsyncpa [#allocation11], 1
    %s430 = scalar_lea.sflag [#allocation11], 1
    %431 = vsyncpa %s430, 1

</llo_original>
